<compile_context>
chip_gen: v7x
topology: tpu7x:2x2x1
jax: 0.10.0
libtpu: 0.0.40
codegen_flags: <defaults>
</compile_context>

<pallas_src>
import jax
import jax.numpy as jnp
from jax import lax
from jax.experimental import pallas as pl
from jax.experimental.pallas import tpu as pltpu

NEG_BIG = -1e18   # same masked_fill value the torch code uses


# ----------------------------- Pallas kernels ------------------------------ #
def input_proj_kernel(x_ref, w_ref, b_ref, out_ref):
    # (T*B, E) @ (E, 8H) + (1, 8H): one well-shaped MXU matmul producing the
    # pre-activations (i,f,g,o fwd | i,f,g,o bwd) for every timestep at once.
    out_ref[...] = (jnp.dot(x_ref[...], w_ref[...],
                            preferred_element_type=jnp.float32)
                    + b_ref[...])


def bilstm_recurrence_kernel(gx_f_ref, gx_b_ref, whh_f_ref, whh_b_ref,
                             mask_ref, h0_ref, c0_ref,
                             out_f_ref, out_b_ref, pooled_ref, hout_ref):
    T, B, _ = gx_f_ref.shape
    H = whh_f_ref.shape[0]
    whh_f = whh_f_ref[...]          # (H, 4H), pre-transposed W_hh
    whh_b = whh_b_ref[...]

    def cell(gx, h, c, whh):
        gates = gx + jnp.dot(h, whh, preferred_element_type=jnp.float32)
        i = jax.nn.sigmoid(gates[:, 0 * H:1 * H])
        f = jax.nn.sigmoid(gates[:, 1 * H:2 * H])
        g = jnp.tanh(gates[:, 2 * H:3 * H])
        o = jax.nn.sigmoid(gates[:, 3 * H:4 * H])
        c_new = f * c + i * g
        h_new = o * jnp.tanh(c_new)
        return h_new, c_new

    h_f, c_f = h0_ref[0], c0_ref[0]
    h_b, c_b = h0_ref[1], c0_ref[1]
    mx_f = jnp.full((B, H), NEG_BIG, dtype=jnp.float32)
    mx_b = jnp.full((B, H), NEG_BIG, dtype=jnp.float32)

    # T is small and static: full unroll (equivalent to fori_loop(unroll=True))
    # keeps every ref index static and gives the scheduler full visibility.
    for t in range(T):
        # ---- forward direction, timestep t ----
        m = mask_ref[t]                              # (B, 1), 1.0 iff t < len
        h_new, c_new = cell(gx_f_ref[t], h_f, c_f, whh_f)
        h_f = m * h_new + (1.0 - m) * h_f            # packed-sequence carry
        c_f = m * c_new + (1.0 - m) * c_f
        y = m * h_new                                # padded outputs are zero
        out_f_ref[t] = y
        mx_f = jnp.maximum(mx_f, jnp.where(m > 0.0, y, NEG_BIG))

        # ---- backward direction, timestep T-1-t ----
        rt = T - 1 - t
        m = mask_ref[rt]
        h_new, c_new = cell(gx_b_ref[rt], h_b, c_b, whh_b)
        h_b = m * h_new + (1.0 - m) * h_b
        c_b = m * c_new + (1.0 - m) * c_b
        y = m * h_new
        out_b_ref[rt] = y
        mx_b = jnp.maximum(mx_b, jnp.where(m > 0.0, y, NEG_BIG))

    # fused masked adaptive_max_pool2d over time + final hidden states h_n
    pooled_ref[...] = jnp.concatenate([mx_f, mx_b], axis=-1)
    hout_ref[...] = jnp.concatenate([h_f, h_b], axis=-1)


# ------------------------------ wrapper ------------------------------------ #
def bilstm_forward(tokens, lengths, params):
    """Mirrors BiLSTM.forward: returns (max_pooled, h_out, unsort_out, lengths)."""
    # TODO(synk): the embedding gather and the host-side variable-length list
    # padding / length-sorting for pack_padded_sequence have no clean Pallas
    # formulation; the gather stays in plain JAX and the sorting is unnecessary
    # because the kernel applies per-element length masks directly.
    x = params["embedding"][tokens]                  # (B, T, E); dropout p=0.0
    B, T, E = x.shape
    H = params["init_h"].shape[1]
    G = 4 * H

    # ---- hoisted input projection: one fused matmul for both directions ----
    x_tm = jnp.transpose(x, (1, 0, 2)).reshape(T * B, E).astype(jnp.float32)
    w_ih_cat = jnp.concatenate([params["w_ih_f"], params["w_ih_b"]], axis=0).T
    b_cat = jnp.concatenate([params["b_ih_f"] + params["b_hh_f"],
                             params["b_ih_b"] + params["b_hh_b"]]
                            ).reshape(1, 2 * G).astype(jnp.float32)

    vmem = pl.BlockSpec(memory_space=pltpu.MemorySpace.VMEM)
    gx = pl.pallas_call(
        input_proj_kernel,
        out_shape=jax.ShapeDtypeStruct((T * B, 2 * G), jnp.float32),
        in_specs=[vmem, vmem, vmem],
        out_specs=vmem,
    )(x_tm, w_ih_cat.astype(jnp.float32), b_cat)
    gx = gx.reshape(T, B, 2 * G)
    gx_f = gx[:, :, :G]                              # (T, B, 4H) fwd gates
    gx_b = gx[:, :, G:]                              # (T, B, 4H) bwd gates

    mask = (jnp.arange(T)[:, None] < lengths[None, :]).astype(jnp.float32)
    mask = mask[:, :, None]                          # (T, B, 1)
    h0 = jnp.broadcast_to(params["init_h"][:, None, :], (2, B, H))
    c0 = jnp.broadcast_to(params["init_c"][:, None, :], (2, B, H))

    out_f, out_b, pooled, h_out = pl.pallas_call(
        bilstm_recurrence_kernel,
        out_shape=(
            jax.ShapeDtypeStruct((T, B, H), jnp.float32),
            jax.ShapeDtypeStruct((T, B, H), jnp.float32),
            jax.ShapeDtypeStruct((B, 2 * H), jnp.float32),
            jax.ShapeDtypeStruct((B, 2 * H), jnp.float32),
        ),
        in_specs=[vmem] * 7,
        out_specs=(vmem, vmem, vmem, vmem),
    )(gx_f, gx_b,
      params["w_hh_f"].T.astype(jnp.float32),
      params["w_hh_b"].T.astype(jnp.float32),
      mask, h0.astype(jnp.float32), c0.astype(jnp.float32))

    unsort_out = jnp.concatenate(
        [jnp.transpose(out_f, (1, 0, 2)), jnp.transpose(out_b, (1, 0, 2))],
        axis=-1)                                     # (B, T, 2H), padded rows 0
    return pooled, h_out, unsort_out, lengths


# ------------------------ plain-JAX reference check ------------------------ #
def _bilstm_ref(tokens, lengths, params):
    x = params["embedding"][tokens]
    B, T, _ = x.shape
    H = params["init_h"].shape[1]

    def run_dir(w_ih, w_hh, b_ih, b_hh, h0, c0, backward):
        h = jnp.broadcast_to(h0[None, :], (B, H))
        c = jnp.broadcast_to(c0[None, :], (B, H))
        outs = [None] * T
        order = range(T - 1, -1, -1) if backward else range(T)
        for t in order:
            gates = x[:, t] @ w_ih.T + h @ w_hh.T + b_ih + b_hh
            i, f, g, o = jnp.split(gates, 4, axis=-1)
            i = jax.nn.sigmoid(i); f = jax.nn.sigmoid(f)
            g = jnp.tanh(g);       o = jax.nn.sigmoid(o)
            c_new = f * c + i * g
            h_new = o * jnp.tanh(c_new)
            valid = (t < lengths)[:, None].astype(x.dtype)
            h = valid * h_new + (1.0 - valid) * h
            c = valid * c_new + (1.0 - valid) * c
            outs[t] = valid * h_new
        return jnp.stack(outs, axis=1), h            # (B, T, H), (B, H)

    out_f, hf = run_dir(params["w_ih_f"], params["w_hh_f"],
                        params["b_ih_f"], params["b_hh_f"],
                        params["init_h"][0], params["init_c"][0], False)
    out_b, hb = run_dir(params["w_ih_b"], params["w_hh_b"],
                        params["b_ih_b"], params["b_hh_b"],
                        params["init_h"][1], params["init_c"][1], True)
    out = jnp.concatenate([out_f, out_b], axis=-1)   # (B, T, 2H)
    valid = jnp.arange(T)[None, :, None] < lengths[:, None, None]
    pooled = jnp.max(jnp.where(valid, out, NEG_BIG), axis=1)
    h_out = jnp.concatenate([hf, hb], axis=-1)
    return pooled, h_out, out, lengths


if __name__ == "__main__":
    B, V, E, H, T = 2, 50, 32, 32, 8      # batch, vocab, emb_dim, hidden, seq
    ks = jax.random.split(jax.random.PRNGKey(0), 12)

    params = {
        "embedding": jax.random.normal(ks[0], (V, E), jnp.float32) * 0.1,
        "w_ih_f": jax.random.normal(ks[1], (4 * H, E), jnp.float32) * 0.1,
        "w_hh_f": jax.random.normal(ks[2], (4 * H, H), jnp.float32) * 0.1,
        "b_ih_f": jax.random.normal(ks[3], (4 * H,), jnp.float32) * 0.1,
        "b_hh_f": jax.random.normal(ks[4], (4 * H,), jnp.float32) * 0.1,
        "w_ih_b": jax.random.normal(ks[5], (4 * H, E), jnp.float32) * 0.1,
        "w_hh_b": jax.random.normal(ks[6], (4 * H, H), jnp.float32) * 0.1,
        "b_ih_b": jax.random.normal(ks[7], (4 * H,), jnp.float32) * 0.1,
        "b_hh_b": jax.random.normal(ks[8], (4 * H,), jnp.float32) * 0.1,
        "init_h": jax.random.uniform(ks[9], (2, H), jnp.float32, -0.01, 0.01),
        "init_c": jax.random.uniform(ks[10], (2, H), jnp.float32, -0.01, 0.01),
    }

    lengths = jnp.array([5, 8], jnp.int32)
    tokens = jax.random.randint(ks[11], (B, T), 1, V)
    # zero-pad beyond true lengths (matches np.pad in the torch forward)
    tokens = jnp.where(jnp.arange(T)[None, :] < lengths[:, None], tokens, 0)

    pooled, h_out, unsort_out, lens_out = jax.block_until_ready(
        bilstm_forward(tokens, lengths, params))

    ref_pooled, ref_hout, ref_out, _ = _bilstm_ref(tokens, lengths, params)

    assert pooled.shape == (B, 2 * H)
    assert h_out.shape == (B, 2 * H)
    assert unsort_out.shape == (B, T, 2 * H)
    tol = 1e-3
    assert float(jnp.max(jnp.abs(pooled - ref_pooled))) < tol
    assert float(jnp.max(jnp.abs(h_out - ref_hout))) < tol
    assert float(jnp.max(jnp.abs(unsort_out - ref_out))) < tol
    assert bool(jnp.all(lens_out == lengths))

    print("KERNEL_OK")
</pallas_src>

<mosaic_0001>
module attributes {stable_mosaic.version = 11 : i64} {
  func.func @input_proj_kernel(%arg0: memref<16x32xf32, #tpu.memory_space<vmem>>, %arg1: memref<32x256xf32, #tpu.memory_space<vmem>>, %arg2: memref<1x256xf32, #tpu.memory_space<vmem>>, %arg3: memref<16x256xf32, #tpu.memory_space<vmem>>) attributes {dimension_semantics = [], scalar_prefetch = 0 : i64, scratch_operands = 0 : i64, tpu.core_type = #tpu.core_type<tc>} {
    %c0 = arith.constant 0 : index
    %c0_0 = arith.constant 0 : index
    %0 = vector.load %arg0[%c0, %c0_0] : memref<16x32xf32, #tpu.memory_space<vmem>>, vector<16x32xf32>
    %c0_1 = arith.constant 0 : index
    %c0_2 = arith.constant 0 : index
    %1 = vector.load %arg1[%c0_1, %c0_2] : memref<32x256xf32, #tpu.memory_space<vmem>>, vector<32x256xf32>
    %cst = arith.constant dense<0.000000e+00> : vector<16x256xf32>
    %2 = tpu.matmul %0, %1, %cst {dimension_numbers = #tpu.dot_dimension_numbers<[1], [0], [0], [1], [0, 0, 1, 1], [], []>} : vector<16x32xf32>, vector<32x256xf32>, vector<16x256xf32> -> vector<16x256xf32>
    %c0_3 = arith.constant 0 : index
    %c0_4 = arith.constant 0 : index
    %3 = vector.load %arg2[%c0_3, %c0_4] : memref<1x256xf32, #tpu.memory_space<vmem>>, vector<1x256xf32>
    %4 = vector.broadcast %3 : vector<1x256xf32> to vector<16x256xf32>
    %5 = arith.addf %2, %4 : vector<16x256xf32>
    %c0_5 = arith.constant 0 : index
    %c0_6 = arith.constant 0 : index
    %6 = vector.load %arg3[%c0_5, %c0_6] : memref<16x256xf32, #tpu.memory_space<vmem>>, vector<16x256xf32>
    tpu.vector_store %arg3[%c0_5, %c0_6], %5 {strides = array<i32>} : memref<16x256xf32, #tpu.memory_space<vmem>>, vector<16x256xf32>,
    return
  }
}

</mosaic_0001>

<llo_original>
// kernel: tpu_custom_call.1
$region0: #{tpu_custom_call.1}
  #allocation0 [shape = 'u32[]', space=smem, size = 0x4, offset = 0x4, fixed_abs, tag = 'smem constant byte address 0x4 - core index']
  #allocation1 [shape = 'u32[144,128]{1,0:T(1,128)}', space=vmem, size = 0x12000, scoped, tag = 'internal scratch']
  %s0 = inlined_call_operand.hbm [shape: f32[16,32], index: 0, kind: input, shape index: {}]
  %s1 = inlined_call_operand.hbm [shape: f32[32,256], index: 1, kind: input, shape index: {}]
  %s2 = inlined_call_operand.vmem [shape: f32[1,256], index: 2, kind: input, shape index: {}]
  %s3 = inlined_call_operand.hbm [shape: f32[16,256], index: 3, kind: output, shape index: {}]
  %s4 = sld [smem:[#allocation0]]
  $region30: #{tpu_custom_call.1} parent=0
    _
  %s6 = ssub.s32 1, %s4
  %s7 = scalar_select 0, %s6, %s4
  $region1: #{tpu_custom_call.1} parent=0
    #allocation2 [shape = 'u8[8192]{0}', space=vmem, size = 0x2000, scoped, tag = 'input window, operand 0, single buffered']
    #allocation3 [shape = 's32[1]{0}', space=sflag, size = 0x4, scoped, tag = 'scoped memory for tpu_custom_call.1']
    #allocation4 [shape = 's32[1]{0}', space=sflag, size = 0x4, scoped, tag = 'scoped memory for tpu_custom_call.1']
    #allocation5 [shape = 'u8[32768]{0}', space=vmem, size = 0x8000, scoped, tag = 'input window, operand 1, single buffered']
    #allocation6 [shape = 's32[1]{0}', space=sflag, size = 0x4, scoped, tag = 'scoped memory for tpu_custom_call.1']
    #allocation7 [shape = 'u8[16384]{0}', space=vmem, size = 0x4000, scoped, tag = 'output window, operand 0, single buffered']
    %8 = vsyncpa [#allocation3], 0
    %9 = vsyncpa [#allocation6], 0
    %10 = vsyncpa [#allocation4], 0
    // Predicated region
    $region2: #{tpu_custom_call.1} parent=1 // pred_check
      _
    $region3: #{tpu_custom_call.1} parent=1 // pred_check_branch
      %12 = sbr.rel (0) target = $region5
    $region4: #{tpu_custom_call.1} parent=1 // pred_region
      %s14 = ssub.s32 256, 256
      %15 = vsyncadd [#allocation3], %s14
      %s16 = sshll.u32 [#allocation2], 4
      %s17 = int_to_ptr.vmem [resolvable:$true] %s16
      %22 = dma.hbm_to_vmem [thread:$0]  %s0, 256, %s17, [#allocation3], 128, 128, 8
    $region5: #{tpu_custom_call.1} parent=1 // pred_fallthru
      _
    // Predicated region
    $region6: #{tpu_custom_call.1} parent=1 // pred_check
      _
    $region7: #{tpu_custom_call.1} parent=1 // pred_check_branch
      %24 = sbr.rel (0) target = $region9
    $region8: #{tpu_custom_call.1} parent=1 // pred_region
      %s26 = ssub.s32 1024, 1024
      %27 = vsyncadd [#allocation6], %s26
      %s28 = sshll.u32 [#allocation5], 4
      %s29 = int_to_ptr.vmem [resolvable:$true] %s28
      %34 = dma.hbm_to_vmem [thread:$0]  %s1, 1024, %s29, [#allocation6], 256, 256, 16
    $region9: #{tpu_custom_call.1} parent=1 // pred_fallthru
      _
    // Predicated region
    $region10: #{tpu_custom_call.1} parent=1 // pred_check
      _
    $region11: #{tpu_custom_call.1} parent=1 // pred_check_branch
      %36 = sbr.rel (0) target = $region13
    $region12: #{tpu_custom_call.1} parent=1 // pred_region
      _
    $region13: #{tpu_custom_call.1} parent=1 // pred_fallthru
      _
    // Predicated region
    $region14: #{tpu_custom_call.1} parent=1 // pred_check
      _
    $region15: #{tpu_custom_call.1} parent=1 // pred_check_branch
      %38 = sbr.rel (0) target = $region17
    $region16: #{tpu_custom_call.1} parent=1 // pred_region
      %39 = dma.done [#allocation3], 256
    $region17: #{tpu_custom_call.1} parent=1 // pred_fallthru
      _
    // Predicated region
    $region18: #{tpu_custom_call.1} parent=1 // pred_check
      _
    $region19: #{tpu_custom_call.1} parent=1 // pred_check_branch
      %41 = sbr.rel (0) target = $region21
    $region20: #{tpu_custom_call.1} parent=1 // pred_region
      %42 = dma.done [#allocation6], 1024
    $region21: #{tpu_custom_call.1} parent=1 // pred_fallthru
      _
    %v43 = vld [vmem:[#allocation2] sm:$0xff]
    %v44 = vld [vmem:[#allocation2 + $0x8] sm:$0xff]
    %v45 = vld [vmem:[#allocation5] sm:$0xff]
    %v46 = vld [vmem:[#allocation5 + $0x8] sm:$0xff]
    %v47 = vld [vmem:[#allocation5 + $0x10] sm:$0xff]
    %v48 = vld [vmem:[#allocation5 + $0x18] sm:$0xff]
    %v49 = vld [vmem:[#allocation5 + $0x20] sm:$0xff]
    %v50 = vld [vmem:[#allocation5 + $0x28] sm:$0xff]
    %v51 = vld [vmem:[#allocation5 + $0x30] sm:$0xff]
    %v52 = vld [vmem:[#allocation5 + $0x38] sm:$0xff]
    %v53 = vld [vmem:[%s2] sm:$0x3]
    %v55 = vlaneseq
    %v56 = vshrl.u32 %v55, 7
    %v57 = vsub.s32 0, %v56
    %v58 = vrot.slane %v53, %v57
    %v59 = vlaneseq
    %v60 = vshrl.u32 %v59, 7
    %v61 = vsub.s32 1, %v60
    %v62 = vrot.slane %v53, %v61
    %vm65 = vcmask 261120
    %v67 = vsel %vm65, %v43, 0
    %v70 = vsel %vm65, %v44, 0
    %72 = vmatprep.subr.mxu0 %v46
    %73 = vmatpush1.msra.mxu0 %v45
    %74 = vmatprep.subr.mxu0 %v48
    %75 = vmatpush1.msra.mxu0 %v47
    %76 = vmatprep.subr.mxu0 %v50
    %77 = vmatpush1.msra.mxu0 %v49
    %78 = vmatprep.subr.mxu0 %v52
    %79 = vmatpush1.msra.mxu0 %v51
    %80 = vmatprep.subr.mxu0 0.0
    %81 = vmatpush1.msra.mxu0 0.0
    %82 = vmatprep.subr.mxu0 0.0
    %83 = vmatpush1.msra.mxu0 0.0
    %84 = vmatprep.subr.mxu0 0.0
    %85 = vmatpush1.msra.mxu0 0.0
    %86 = vmatprep.subr.mxu0 0.0
    %87 = vmatpush1.msra.mxu0 0.0
    %88 = vmatprep.subr.mxu0 0.0
    %89 = vmatpush1.msra.mxu0 0.0
    %90 = vmatprep.subr.mxu0 0.0
    %91 = vmatpush1.msra.mxu0 0.0
    %92 = vmatprep.subr.mxu0 0.0
    %93 = vmatpush1.msra.mxu0 0.0
    %94 = vmatprep.subr.mxu0 0.0
    %95 = vmatpush1.msra.mxu0 0.0
    %96 = vmatprep.subr.mxu0 0.0
    %97 = vmatpush1.msra.mxu0 0.0
    %98 = vmatprep.subr.mxu0 0.0
    %99 = vmatpush1.msra.mxu0 0.0
    %100 = vmatprep.subr.mxu0 0.0
    %101 = vmatpush1.msra.mxu0 0.0
    %102 = vmatprep.subr.mxu0 0.0
    %103 = vmatpush1.msra.mxu0 0.0
    %104 = vmatprep.subr.mxu0 0.0
    %105 = vmatpush1.msra.mxu0 0.0
    %106 = vmatprep.subr.mxu0 0.0
    %107 = vmatpush1.msra.mxu0 0.0
    %108 = vmatprep.subr.mxu0 0.0
    %109 = vmatpush1.msra.mxu0 0.0
    %110 = vmatprep.subr.mxu0 0.0
    %111 = vmatpush1.msra.mxu0 0.0
    %112 = vmatprep.subr.mxu0 0.0
    %113 = vmatpush1.msra.mxu0 0.0
    %114 = vmatprep.subr.mxu0 0.0
    %115 = vmatpush1.msra.mxu0 0.0
    %116 = vmatprep.subr.mxu0 0.0
    %117 = vmatpush1.msra.mxu0 0.0
    %118 = vmatprep.subr.mxu0 0.0
    %119 = vmatpush1.msra.mxu0 0.0
    %120 = vmatprep.subr.mxu0 0.0
    %121 = vmatpush1.msra.mxu0 0.0
    %122 = vmatprep.subr.mxu0 0.0
    %123 = vmatpush1.msra.mxu0 0.0
    %124 = vmatprep.subr.mxu0 0.0
    %125 = vmatpush1.msra.mxu0 0.0
    %126 = vmatprep.subr.mxu0 0.0
    %127 = vmatpush1.msra.mxu0 0.0
    %128 = vmatprep.subr.mxu0 0.0
    %129 = vmatpush1.msra.mxu0 0.0
    %130 = vmatprep.subr.mxu0 0.0
    %131 = vmatpush1.msra.mxu0 0.0
    %132 = vmatprep.subr.mxu0 0.0
    %133 = vmatpush1.msra.mxu0 0.0
    %134 = vmatprep.subr.mxu0 0.0
    %135 = vmatpush1.msra.mxu0 0.0
    %136 = vmatprep.mubr.f32.mxu0 0.0
    %137 = vmatmul.mubr.f32.gmra.mrb[0].mxu0 %v67
    %v138 = vpop.f32.mrb[0].mxu0
    %v139 = vadd.f32 %v58, %v138
    %v140 = vpop.f32.mrb[0].mxu0
    %v141 = vadd.f32 %v62, %v140
    %142 = vmatprep.mubr.f32.mxu0 0.0
    %143 = vmatmul.mubr.f32.gmra.mrb[0].mxu0 %v70
    %v144 = vpop.f32.mrb[0].mxu0
    %v145 = vadd.f32 %v58, %v144
    %v146 = vpop.f32.mrb[0].mxu0
    %v147 = vadd.f32 %v62, %v146
    %148 = vdwg.mxu0
    %149 = vst [vmem:[#allocation7] sm:$0xff] %v139
    %150 = vst [vmem:[#allocation7 + $0x8] sm:$0xff] %v141
    %151 = vst [vmem:[#allocation7 + $0x10] sm:$0xff] %v145
    %152 = vst [vmem:[#allocation7 + $0x18] sm:$0xff] %v147
    // Predicated region
    $region22: #{tpu_custom_call.1} parent=1 // pred_check
      _
    $region23: #{tpu_custom_call.1} parent=1 // pred_check_branch
      %154 = sbr.rel (0) target = $region25
    $region24: #{tpu_custom_call.1} parent=1 // pred_region
      %s156 = ssub.s32 512, 512
      %157 = vsyncadd [#allocation4], %s156
      %s158 = sshll.u32 [#allocation7], 4
      %s159 = int_to_ptr.vmem [resolvable:$true] %s158
      %164 = dma.vmem_to_hbm [thread:$0]  %s159, 512, %s3, [#allocation4], 256, 256, 16
    $region25: #{tpu_custom_call.1} parent=1 // pred_fallthru
      _
    // Predicated region
    $region26: #{tpu_custom_call.1} parent=1 // pred_check
      _
    $region27: #{tpu_custom_call.1} parent=1 // pred_check_branch
      %166 = sbr.rel (0) target = $region29
    $region28: #{tpu_custom_call.1} parent=1 // pred_region
      %167 = dma.done [#allocation4], 512
    $region29: #{tpu_custom_call.1} parent=1 // pred_fallthru
      _
    %168 = vsyncpa [#allocation3], 1
    %169 = vsyncpa [#allocation6], 1
    %170 = vsyncpa [#allocation4], 1

</llo_original>
